<compile_context>
chip_gen: v7x
topology: tpu7x:2x2x1
jax: 0.10.0
libtpu: 0.0.40
codegen_flags: <defaults>
</compile_context>

<pallas_src>
import functools

import jax
import jax.numpy as jnp
from jax.experimental import pallas as pl
from jax.experimental.pallas import tpu as pltpu

_LANE = 128
_SUBLANE = 8
_MAX_TILE_M = 2048        # ~2.3 MiB/step double-buffered -> fits v5e/v6e/v7x scoped VMEM
_SPLIT_BATCH = 256        # force >=2 grid steps above this so v7x's 2nd TC isn't idle
_XLA_FALLBACK_BATCH = 64  # below this the fixed pallas_call cost dominates -> plain XLA


def _cdiv(a, b):
    return (a + b - 1) // b


def _round_up(x, m):
    return _cdiv(x, m) * m


def _choose_tiling(batch, min_itemsize):
    """Pad batch only to a sublane-aligned multiple, then pick a tile that divides it."""
    # Sub-32-bit dtypes pack along sublanes: keep tiles 16-row aligned for bf16.
    align = _SUBLANE * max(1, 4 // int(min_itemsize))
    batch_a = _round_up(max(batch, 1), align)
    n_tiles = _cdiv(batch_a, _MAX_TILE_M)
    if batch_a >= _SPLIT_BATCH and n_tiles < 2:
        n_tiles = 2                      # give both v7x TensorCores work
    tile_m = _round_up(_cdiv(batch_a, n_tiles), align)
    padded_batch = tile_m * n_tiles
    return tile_m, padded_batch


# ---------------------------------------------------------------------------
# Pallas kernel (single fused kernel for both model=True / model=False; the
# only difference is what the fused head weight contains).
# ---------------------------------------------------------------------------
def _actor_mlp_kernel(obs_ref, w1_ref, b1_ref, w2_ref, b2_ref, wh_ref, bh_ref,
                      out_ref):
    # obs already arrives in the weight dtype (cast once in the wrapper).
    # All matmuls accumulate in fp32; bias add / relu run on the VPU in fp32.
    x = obs_ref[...]
    hid = jnp.dot(x, w1_ref[...], preferred_element_type=jnp.float32) + b1_ref[...]
    hid = jnp.maximum(hid, 0.0)

    hid = jnp.dot(hid.astype(w2_ref.dtype), w2_ref[...],
                  preferred_element_type=jnp.float32) + b2_ref[...]
    hid = jnp.maximum(hid, 0.0)

    # fused heads: [policy | next_state] in one lane-dense (128-padded) slab
    out = jnp.dot(hid.astype(wh_ref.dtype), wh_ref[...],
                  preferred_element_type=jnp.float32) + bh_ref[...]
    out_ref[...] = out.astype(out_ref.dtype)


# ---------------------------------------------------------------------------
# One-time parameter preparation (call OUTSIDE the jitted forward).
#   - transpose weights to [in, out]
#   - fuse policy/model heads along the output axis
#   - pad the fused head to a multiple of 128 lanes
#   - cast weights to bf16 by default (MXU dtype on all generations); biases fp32
# ---------------------------------------------------------------------------
def prepare_params(params, *, model=False, weight_dtype=jnp.bfloat16):
    w1 = jnp.asarray(params["w1"]).T.astype(weight_dtype)   # [in, hidden]
    w2 = jnp.asarray(params["w2"]).T.astype(weight_dtype)   # [hidden, hidden]
    hidden = w1.shape[1]

    if model:
        wh = jnp.concatenate([params["wp"].T, params["wm"].T], axis=1)  # [hidden, out+in]
        bh = jnp.concatenate([params["bp"], params["bm"]], axis=0)
    else:
        wh = params["wp"].T                                             # [hidden, out]
        bh = params["bp"]

    head_dim = wh.shape[1]
    head_pad = _round_up(head_dim, _LANE)
    wh = jnp.pad(wh, ((0, 0), (0, head_pad - head_dim))).astype(weight_dtype)
    bh = jnp.pad(bh, (0, head_pad - head_dim)).astype(jnp.float32)

    return dict(
        w1=w1,
        b1=jnp.asarray(params["b1"]).reshape(1, hidden).astype(jnp.float32),
        w2=w2,
        b2=jnp.asarray(params["b2"]).reshape(1, hidden).astype(jnp.float32),
        wh=wh,
        bh=bh.reshape(1, head_pad),
    )


# ---------------------------------------------------------------------------
# Forward wrapper
# ---------------------------------------------------------------------------
@functools.partial(jax.jit,
                   static_argnames=("model", "out_dim", "out_dtype", "use_xla_below"))
def actor_network_forward(obs, prep, *, model=False, out_dim,
                          out_dtype=jnp.float32,
                          use_xla_below=_XLA_FALLBACK_BATCH):
    """Pallas ActorNetwork forward.

    obs:  [batch, input_dim] float32
    prep: output of prepare_params(...)
    Returns [policy] or [policy, next_state].
    """
    batch, input_dim = obs.shape
    hidden = prep["w1"].shape[1]
    head_pad = prep["wh"].shape[1]
    w_dtype = prep["w1"].dtype

    # One cast for the whole call (halves obs DMA for bf16 weights); fp32 math
    # inside stays fp32 via preferred_element_type.
    x = obs.astype(w_dtype)

    if batch <= use_xla_below:
        # Small-batch path: three tiny matmuls finish in a few hundred ns; the
        # fixed pallas_call / grid-step / weight-DMA cost would dominate.
        hid = jnp.maximum(
            jnp.dot(x, prep["w1"], preferred_element_type=jnp.float32) + prep["b1"], 0.0)
        hid = jnp.maximum(
            jnp.dot(hid.astype(w_dtype), prep["w2"],
                    preferred_element_type=jnp.float32) + prep["b2"], 0.0)
        out = (jnp.dot(hid.astype(w_dtype), prep["wh"],
                       preferred_element_type=jnp.float32) + prep["bh"]).astype(out_dtype)
        # TODO(synk): for RL inference, fuse sampling / critic heads here or into the kernel.
    else:
        min_itemsize = min(jnp.dtype(w_dtype).itemsize, jnp.dtype(out_dtype).itemsize)
        tile_m, padded_batch = _choose_tiling(batch, min_itemsize)
        if padded_batch != batch:
            x = jnp.pad(x, ((0, padded_batch - batch), (0, 0)))
        grid = (padded_batch // tile_m,)

        flops = 2 * padded_batch * (input_dim * hidden + hidden * hidden + hidden * head_pad)
        bytes_accessed = (
            x.size * x.dtype.itemsize
            + sum(prep[k].size * prep[k].dtype.itemsize
                  for k in ("w1", "b1", "w2", "b2", "wh", "bh"))
            + padded_batch * head_pad * jnp.dtype(out_dtype).itemsize
        )

        def resident(arr):
            nd = arr.ndim
            return pl.BlockSpec(arr.shape, lambda i, _nd=nd: (0,) * _nd)

        out = pl.pallas_call(
            _actor_mlp_kernel,
            out_shape=jax.ShapeDtypeStruct((padded_batch, head_pad), out_dtype),
            grid=grid,
            in_specs=[
                pl.BlockSpec((tile_m, input_dim), lambda i: (i, 0)),  # obs tiles stream
                resident(prep["w1"]), resident(prep["b1"]),
                resident(prep["w2"]), resident(prep["b2"]),
                resident(prep["wh"]), resident(prep["bh"]),
            ],
            out_specs=pl.BlockSpec((tile_m, head_pad), lambda i: (i, 0)),
            compiler_params=pltpu.CompilerParams(
                dimension_semantics=("parallel",)),  # batch tiles shard across v7x's 2 TCs
            cost_estimate=pl.CostEstimate(
                flops=flops, transcendentals=0, bytes_accessed=bytes_accessed),
        )(x, prep["w1"], prep["b1"], prep["w2"], prep["b2"],
          prep["wh"], prep["bh"])

    policy = out[:batch, :out_dim]
    if model:
        next_state = out[:batch, out_dim:out_dim + input_dim]
        return [policy, next_state]
    return [policy]


# ---------------------------------------------------------------------------
# Deterministic parameter init (PyTorch nn.Linear shape conventions)
# ---------------------------------------------------------------------------
def init_params(key, input_dim, hidden, out_dim):
    ks = jax.random.split(key, 8)

    def linear_init(kw, kb, fan_in, fan_out):
        bound = 1.0 / jnp.sqrt(fan_in)
        w = jax.random.uniform(kw, (fan_out, fan_in), jnp.float32, -bound, bound)
        b = jax.random.uniform(kb, (fan_out,), jnp.float32, -bound, bound)
        return w, b

    w1, b1 = linear_init(ks[0], ks[1], input_dim, hidden)
    w2, b2 = linear_init(ks[2], ks[3], hidden, hidden)
    wp, bp = linear_init(ks[4], ks[5], hidden, out_dim)
    wm, bm = linear_init(ks[6], ks[7], hidden, input_dim)
    return dict(w1=w1, b1=b1, w2=w2, b2=b2, wp=wp, bp=bp, wm=wm, bm=bm)


def reference_forward(obs, p, model=False):
    relu = lambda x: jnp.maximum(x, 0.0)
    hid = relu(obs @ p["w1"].T + p["b1"])
    hid = relu(hid @ p["w2"].T + p["b2"])
    out = [hid @ p["wp"].T + p["bp"]]
    if model:
        out += [hid @ p["wm"].T + p["bm"]]
    return out


if __name__ == "__main__":
    key = jax.random.PRNGKey(0)
    k_obs, k_params, k_big = jax.random.split(key, 3)

    batch, input_dim, hidden, out_dim = 8, 16, 32, 8  # arglist.hidden := 32

    obs = jax.random.normal(k_obs, (batch, input_dim), jnp.float32)
    params = init_params(k_params, input_dim, hidden, out_dim)

    # One-time (non-jit) parameter prep: transpose, head fusion, lane padding.
    prep_f32 = prepare_params(params, model=True, weight_dtype=jnp.float32)
    prep_bf16 = prepare_params(params, model=True)                     # bf16 default
    prep_f32_policy = prepare_params(params, model=False, weight_dtype=jnp.float32)

    refs = reference_forward(obs, params, model=True)

    # --- Pallas path, fp32 weights (use_xla_below=0 forces the kernel at batch=8).
    outs = actor_network_forward(obs, prep_f32, model=True, out_dim=out_dim,
                                 use_xla_below=0)
    outs = [jax.block_until_ready(o) for o in outs]
    for o, r in zip(outs, refs):
        assert o.shape == r.shape, (o.shape, r.shape)
        assert jnp.max(jnp.abs(o - r)) < 1e-4

    # --- Pallas path, model=False (single policy head).
    outs_p = actor_network_forward(obs, prep_f32_policy, model=False, out_dim=out_dim,
                                   use_xla_below=0)
    outs_p = [jax.block_until_ready(o) for o in outs_p]
    refs_p = reference_forward(obs, params, model=False)
    assert len(outs_p) == 1
    assert jnp.max(jnp.abs(outs_p[0] - refs_p[0])) < 1e-4

    # --- Pallas path, bf16 weights (default prep): fp32 accumulate, looser tol.
    outs_bf = actor_network_forward(obs, prep_bf16, model=True, out_dim=out_dim,
                                    use_xla_below=0)
    outs_bf = [jax.block_until_ready(o) for o in outs_bf]
    for o, r in zip(outs_bf, refs):
        assert o.shape == r.shape
        assert jnp.max(jnp.abs(o - r)) < 5e-2

    # --- Small-batch XLA fallback (default threshold) matches too.
    outs_fb = actor_network_forward(obs, prep_f32, model=True, out_dim=out_dim)
    outs_fb = [jax.block_until_ready(o) for o in outs_fb]
    for o, r in zip(outs_fb, refs):
        assert jnp.max(jnp.abs(o - r)) < 1e-4

    # --- Larger, non-multiple batch: tight padding (300 -> 304/320, not 512) and
    #     a 2-step "parallel" grid so both v7x TensorCores are used.
    big_batch = 300
    big_obs = jax.random.normal(k_big, (big_batch, input_dim), jnp.float32)
    refs_b = reference_forward(big_obs, params, model=True)

    outs_b = actor_network_forward(big_obs, prep_f32, model=True, out_dim=out_dim)
    outs_b = [jax.block_until_ready(o) for o in outs_b]
    for o, r in zip(outs_b, refs_b):
        assert o.shape == r.shape
        assert jnp.max(jnp.abs(o - r)) < 1e-4

    outs_bb = actor_network_forward(big_obs, prep_bf16, model=True, out_dim=out_dim)
    outs_bb = [jax.block_until_ready(o) for o in outs_bb]
    for o, r in zip(outs_bb, refs_b):
        assert o.shape == r.shape
        assert jnp.max(jnp.abs(o - r)) < 5e-2

    print("KERNEL_OK")
</pallas_src>

<mosaic_0001>
module attributes {stable_mosaic.version = 11 : i64} {
  func.func @_actor_mlp_kernel(%arg0: i32, %arg1: memref<8x16xf32, #tpu.memory_space<vmem>>, %arg2: memref<16x32xf32, #tpu.memory_space<vmem>>, %arg3: memref<1x32xf32, #tpu.memory_space<vmem>>, %arg4: memref<32x32xf32, #tpu.memory_space<vmem>>, %arg5: memref<1x32xf32, #tpu.memory_space<vmem>>, %arg6: memref<32x128xf32, #tpu.memory_space<vmem>>, %arg7: memref<1x128xf32, #tpu.memory_space<vmem>>, %arg8: memref<8x128xf32, #tpu.memory_space<vmem>>) attributes {dimension_semantics = [#tpu.dimension_semantics<parallel>], iteration_bounds = array<i64: 1>, scalar_prefetch = 0 : i64, scratch_operands = 0 : i64, tpu.core_type = #tpu.core_type<tc>, window_params = [{transform_indices = @transform_0, window_bounds = array<i64: 8, 16>}, {pipeline_mode = #tpu.pipeline_mode<synchronous>, transform_indices = @transform_1, window_bounds = array<i64: 16, 32>}, {pipeline_mode = #tpu.pipeline_mode<synchronous>, transform_indices = @transform_2, window_bounds = array<i64: 1, 32>}, {pipeline_mode = #tpu.pipeline_mode<synchronous>, transform_indices = @transform_3, window_bounds = array<i64: 32, 32>}, {pipeline_mode = #tpu.pipeline_mode<synchronous>, transform_indices = @transform_4, window_bounds = array<i64: 1, 32>}, {pipeline_mode = #tpu.pipeline_mode<synchronous>, transform_indices = @transform_5, window_bounds = array<i64: 32, 128>}, {pipeline_mode = #tpu.pipeline_mode<synchronous>, transform_indices = @transform_6, window_bounds = array<i64: 1, 128>}, {transform_indices = @transform_7, window_bounds = array<i64: 8, 128>}]} {
    %c0 = arith.constant 0 : index
    %c0_0 = arith.constant 0 : index
    %0 = vector.load %arg1[%c0, %c0_0] : memref<8x16xf32, #tpu.memory_space<vmem>>, vector<8x16xf32>
    %c0_1 = arith.constant 0 : index
    %c0_2 = arith.constant 0 : index
    %1 = vector.load %arg2[%c0_1, %c0_2] : memref<16x32xf32, #tpu.memory_space<vmem>>, vector<16x32xf32>
    %cst = arith.constant dense<0.000000e+00> : vector<8x32xf32>
    %2 = tpu.matmul %0, %1, %cst {dimension_numbers = #tpu.dot_dimension_numbers<[1], [0], [0], [1], [0, 0, 1, 1], [], []>} : vector<8x16xf32>, vector<16x32xf32>, vector<8x32xf32> -> vector<8x32xf32>
    %c0_3 = arith.constant 0 : index
    %c0_4 = arith.constant 0 : index
    %3 = vector.load %arg3[%c0_3, %c0_4] : memref<1x32xf32, #tpu.memory_space<vmem>>, vector<1x32xf32>
    %4 = vector.broadcast %3 : vector<1x32xf32> to vector<8x32xf32>
    %5 = arith.addf %2, %4 : vector<8x32xf32>
    %cst_5 = arith.constant 0.000000e+00 : f32
    %6 = vector.broadcast %cst_5 : f32 to vector<8x32xf32>
    %7 = arith.maximumf %5, %6 : vector<8x32xf32>
    %c0_6 = arith.constant 0 : index
    %c0_7 = arith.constant 0 : index
    %8 = vector.load %arg4[%c0_6, %c0_7] : memref<32x32xf32, #tpu.memory_space<vmem>>, vector<32x32xf32>
    %cst_8 = arith.constant dense<0.000000e+00> : vector<8x32xf32>
    %9 = tpu.matmul %7, %8, %cst_8 {dimension_numbers = #tpu.dot_dimension_numbers<[1], [0], [0], [1], [0, 0, 1, 1], [], []>} : vector<8x32xf32>, vector<32x32xf32>, vector<8x32xf32> -> vector<8x32xf32>
    %c0_9 = arith.constant 0 : index
    %c0_10 = arith.constant 0 : index
    %10 = vector.load %arg5[%c0_9, %c0_10] : memref<1x32xf32, #tpu.memory_space<vmem>>, vector<1x32xf32>
    %11 = vector.broadcast %10 : vector<1x32xf32> to vector<8x32xf32>
    %12 = arith.addf %9, %11 : vector<8x32xf32>
    %cst_11 = arith.constant 0.000000e+00 : f32
    %13 = vector.broadcast %cst_11 : f32 to vector<8x32xf32>
    %14 = arith.maximumf %12, %13 : vector<8x32xf32>
    %c0_12 = arith.constant 0 : index
    %c0_13 = arith.constant 0 : index
    %15 = vector.load %arg6[%c0_12, %c0_13] : memref<32x128xf32, #tpu.memory_space<vmem>>, vector<32x128xf32>
    %cst_14 = arith.constant dense<0.000000e+00> : vector<8x128xf32>
    %16 = tpu.matmul %14, %15, %cst_14 {dimension_numbers = #tpu.dot_dimension_numbers<[1], [0], [0], [1], [0, 0, 1, 1], [], []>} : vector<8x32xf32>, vector<32x128xf32>, vector<8x128xf32> -> vector<8x128xf32>
    %c0_15 = arith.constant 0 : index
    %c0_16 = arith.constant 0 : index
    %17 = vector.load %arg7[%c0_15, %c0_16] : memref<1x128xf32, #tpu.memory_space<vmem>>, vector<1x128xf32>
    %18 = vector.broadcast %17 : vector<1x128xf32> to vector<8x128xf32>
    %19 = arith.addf %16, %18 : vector<8x128xf32>
    %c0_17 = arith.constant 0 : index
    %c0_18 = arith.constant 0 : index
    %20 = vector.load %arg8[%c0_17, %c0_18] : memref<8x128xf32, #tpu.memory_space<vmem>>, vector<8x128xf32>
    tpu.vector_store %arg8[%c0_17, %c0_18], %19 {strides = array<i32>} : memref<8x128xf32, #tpu.memory_space<vmem>>, vector<8x128xf32>,
    return
  }
  func.func @transform_0(%arg0: i32) -> (i32, i32) {
    %c0_i32 = arith.constant 0 : i32
    %c0_i32_0 = arith.constant 0 : i32
    return %arg0, %c0_i32 : i32, i32
  }
  func.func @transform_1(%arg0: i32) -> (i32, i32) {
    %c0_i32 = arith.constant 0 : i32
    %c0_i32_0 = arith.constant 0 : i32
    %c0_i32_1 = arith.constant 0 : i32
    return %c0_i32, %c0_i32_0 : i32, i32
  }
  func.func @transform_2(%arg0: i32) -> (i32, i32) {
    %c0_i32 = arith.constant 0 : i32
    %c0_i32_0 = arith.constant 0 : i32
    %c0_i32_1 = arith.constant 0 : i32
    return %c0_i32, %c0_i32_0 : i32, i32
  }
  func.func @transform_3(%arg0: i32) -> (i32, i32) {
    %c0_i32 = arith.constant 0 : i32
    %c0_i32_0 = arith.constant 0 : i32
    %c0_i32_1 = arith.constant 0 : i32
    return %c0_i32, %c0_i32_0 : i32, i32
  }
  func.func @transform_4(%arg0: i32) -> (i32, i32) {
    %c0_i32 = arith.constant 0 : i32
    %c0_i32_0 = arith.constant 0 : i32
    %c0_i32_1 = arith.constant 0 : i32
    return %c0_i32, %c0_i32_0 : i32, i32
  }
  func.func @transform_5(%arg0: i32) -> (i32, i32) {
    %c0_i32 = arith.constant 0 : i32
    %c0_i32_0 = arith.constant 0 : i32
    %c0_i32_1 = arith.constant 0 : i32
    return %c0_i32, %c0_i32_0 : i32, i32
  }
  func.func @transform_6(%arg0: i32) -> (i32, i32) {
    %c0_i32 = arith.constant 0 : i32
    %c0_i32_0 = arith.constant 0 : i32
    %c0_i32_1 = arith.constant 0 : i32
    return %c0_i32, %c0_i32_0 : i32, i32
  }
  func.func @transform_7(%arg0: i32) -> (i32, i32) {
    %c0_i32 = arith.constant 0 : i32
    %c0_i32_0 = arith.constant 0 : i32
    return %arg0, %c0_i32 : i32, i32
  }
}

</mosaic_0001>

<llo_original>
// kernel: actor_network_forward.1
$region0: #{actor_network_forward.1}
  #allocation0 [shape = 'u32[]', space=smem, size = 0x4, offset = 0x4, fixed_abs, tag = 'smem constant byte address 0x4 - core index']
  #allocation1 [shape = 'u32[144,128]{1,0:T(1,128)}', space=vmem, size = 0x12000, scoped, tag = 'internal scratch']
  %s0 = inlined_call_operand.hbm [shape: f32[8,16], index: 0, kind: input, shape index: {}]
  %s1 = inlined_call_operand.hbm [shape: f32[16,32], index: 1, kind: input, shape index: {}]
  %s2 = inlined_call_operand.vmem [shape: f32[1,32], index: 2, kind: input, shape index: {}]
  %s3 = inlined_call_operand.hbm [shape: f32[32,32], index: 3, kind: input, shape index: {}]
  %s4 = inlined_call_operand.vmem [shape: f32[1,32], index: 4, kind: input, shape index: {}]
  %s5 = inlined_call_operand.hbm [shape: f32[32,128], index: 5, kind: input, shape index: {}]
  %s6 = inlined_call_operand.vmem [shape: f32[1,128], index: 6, kind: input, shape index: {}]
  %s7 = inlined_call_operand.vmem [shape: f32[8,128], index: 7, kind: output, shape index: {}]
  %s8 = sld [smem:[#allocation0]]
  $region54: #{actor_network_forward.1} parent=0
    _
  %s10 = ssub.s32 1, %s8
  %s11 = scalar_select 0, %s10, %s8
  $region1: #{actor_network_forward.1} parent=0
    #allocation2 [shape = 'u8[4096]{0}', space=vmem, size = 0x1000, scoped, tag = 'input window, operand 0, single buffered']
    #allocation3 [shape = 's32[1]{0}', space=sflag, size = 0x4, scoped, tag = 'scoped memory for actor_network_forward.1']
    #allocation4 [shape = 'u8[8192]{0}', space=vmem, size = 0x2000, scoped, tag = 'input window, operand 1, single buffered']
    #allocation5 [shape = 's32[1]{0}', space=sflag, size = 0x4, scoped, tag = 'scoped memory for actor_network_forward.1']
    #allocation6 [shape = 'u8[16384]{0}', space=vmem, size = 0x4000, scoped, tag = 'input window, operand 3, single buffered']
    #allocation7 [shape = 'u8[16384]{0}', space=vmem, size = 0x4000, scoped, tag = 'input window, operand 5, single buffered']
    #allocation8 [shape = 's32[1]{0}', space=sflag, size = 0x4, scoped, tag = 'scoped memory for actor_network_forward.1']
    %12 = vsyncpa [#allocation3], 0
    %13 = vsyncpa [#allocation5], 0
    %14 = vsyncpa [#allocation8], 0
    // Predicated region
    $region2: #{actor_network_forward.1} parent=1 // pred_check
      _
    $region3: #{actor_network_forward.1} parent=1 // pred_check_branch
      %16 = sbr.rel (0) target = $region5
    $region4: #{actor_network_forward.1} parent=1 // pred_region
      %s18 = ssub.s32 128, 128
      %19 = vsyncadd [#allocation3], %s18
      %s21 = sshll.u32 [#allocation2], 4
      %s22 = int_to_ptr.vmem [resolvable:$true] %s21
      %24 = dma.hbm_to_vmem [thread:$0]  %s0, 128, %s22, [#allocation3]
    $region5: #{actor_network_forward.1} parent=1 // pred_fallthru
      _
    // Predicated region
    $region6: #{actor_network_forward.1} parent=1 // pred_check
      _
    $region7: #{actor_network_forward.1} parent=1 // pred_check_branch
      %26 = sbr.rel (0) target = $region9
    $region8: #{actor_network_forward.1} parent=1 // pred_region
      %s28 = ssub.s32 256, 256
      %29 = vsyncadd [#allocation5], %s28
      %s30 = sshll.u32 [#allocation4], 4
      %s31 = int_to_ptr.vmem [resolvable:$true] %s30
      %36 = dma.hbm_to_vmem [thread:$0]  %s1, 256, %s31, [#allocation5], 128, 128, 8
    $region9: #{actor_network_forward.1} parent=1 // pred_fallthru
      _
    // Predicated region
    $region10: #{actor_network_forward.1} parent=1 // pred_check
      _
    $region11: #{actor_network_forward.1} parent=1 // pred_check_branch
      %38 = sbr.rel (0) target = $region13
    $region12: #{actor_network_forward.1} parent=1 // pred_region
      _
    $region13: #{actor_network_forward.1} parent=1 // pred_fallthru
      _
    // Predicated region
    $region14: #{actor_network_forward.1} parent=1 // pred_check
      _
    $region15: #{actor_network_forward.1} parent=1 // pred_check_branch
      %40 = sbr.rel (0) target = $region17
    $region16: #{actor_network_forward.1} parent=1 // pred_region
      %s42 = ssub.s32 512, 512
      %43 = vsyncadd [#allocation5], %s42
      %s44 = sshll.u32 [#allocation6], 4
      %s45 = int_to_ptr.vmem [resolvable:$true] %s44
      %50 = dma.hbm_to_vmem [thread:$0]  %s3, 512, %s45, [#allocation5], 128, 128, 8
    $region17: #{actor_network_forward.1} parent=1 // pred_fallthru
      _
    // Predicated region
    $region18: #{actor_network_forward.1} parent=1 // pred_check
      _
    $region19: #{actor_network_forward.1} parent=1 // pred_check_branch
      %52 = sbr.rel (0) target = $region21
    $region20: #{actor_network_forward.1} parent=1 // pred_region
      _
    $region21: #{actor_network_forward.1} parent=1 // pred_fallthru
      _
    // Predicated region
    $region22: #{actor_network_forward.1} parent=1 // pred_check
      _
    $region23: #{actor_network_forward.1} parent=1 // pred_check_branch
      %54 = sbr.rel (0) target = $region25
    $region24: #{actor_network_forward.1} parent=1 // pred_region
      %s56 = ssub.s32 512, 512
      %57 = vsyncadd [#allocation8], %s56
      %s58 = sshll.u32 [#allocation7], 4
      %s59 = int_to_ptr.vmem [resolvable:$true] %s58
      %64 = dma.hbm_to_vmem [thread:$0]  %s5, 512, %s59, [#allocation8], 128, 128, 8
    $region25: #{actor_network_forward.1} parent=1 // pred_fallthru
      _
    // Predicated region
    $region26: #{actor_network_forward.1} parent=1 // pred_check
      _
    $region27: #{actor_network_forward.1} parent=1 // pred_check_branch
      %66 = sbr.rel (0) target = $region29
    $region28: #{actor_network_forward.1} parent=1 // pred_region
      _
    $region29: #{actor_network_forward.1} parent=1 // pred_fallthru
      _
    // Predicated region
    $region30: #{actor_network_forward.1} parent=1 // pred_check
      _
    $region31: #{actor_network_forward.1} parent=1 // pred_check_branch
      %68 = sbr.rel (0) target = $region33
    $region32: #{actor_network_forward.1} parent=1 // pred_region
      %69 = dma.done [#allocation3], 128
    $region33: #{actor_network_forward.1} parent=1 // pred_fallthru
      _
    // Predicated region
    $region34: #{actor_network_forward.1} parent=1 // pred_check
      _
    $region35: #{actor_network_forward.1} parent=1 // pred_check_branch
      %71 = sbr.rel (0) target = $region37
    $region36: #{actor_network_forward.1} parent=1 // pred_region
      %72 = dma.done [#allocation5], 256
    $region37: #{actor_network_forward.1} parent=1 // pred_fallthru
      _
    // Predicated region
    $region38: #{actor_network_forward.1} parent=1 // pred_check
      _
    $region39: #{actor_network_forward.1} parent=1 // pred_check_branch
      %74 = sbr.rel (0) target = $region41
    $region40: #{actor_network_forward.1} parent=1 // pred_region
      %75 = dma.done [#allocation5], 512
    $region41: #{actor_network_forward.1} parent=1 // pred_fallthru
      _
    // Predicated region
    $region42: #{actor_network_forward.1} parent=1 // pred_check
      _
    $region43: #{actor_network_forward.1} parent=1 // pred_check_branch
      %77 = sbr.rel (0) target = $region45
    $region44: #{actor_network_forward.1} parent=1 // pred_region
      %78 = dma.done [#allocation8], 512
    $region45: #{actor_network_forward.1} parent=1 // pred_fallthru
      _
    %v79 = vld [vmem:[#allocation2] sm:$0xff]
    %v80 = vld [vmem:[#allocation4] sm:$0xff]
    %v81 = vld [vmem:[#allocation4 + $0x8] sm:$0xff]
    %v82 = vld [vmem:[%s2] sm:$0x1]
    %v84 = vlaneseq
    %v85 = vshrl.u32 %v84, 7
    %v86 = vsub.s32 0, %v85
    %v87 = vrot.slane %v82, %v86
    %vm89 = vcmask 130048
    %v91 = vsel %vm89, %v79, 0
    %93 = vmatprep.subr.mxu0 0.0
    %94 = vmatpush1.msra.mxu0 %v80
    %95 = vmatprep.subr.mxu0 0.0
    %96 = vmatpush1.msra.mxu0 %v81
    %97 = vmatprep.subr.mxu0 0.0
    %98 = vmatpush1.msra.mxu0 0.0
    %99 = vmatprep.subr.mxu0 0.0
    %100 = vmatpush1.msra.mxu0 0.0
    %101 = vmatprep.subr.mxu0 0.0
    %102 = vmatpush1.msra.mxu0 0.0
    %103 = vmatprep.subr.mxu0 0.0
    %104 = vmatpush1.msra.mxu0 0.0
    %105 = vmatprep.subr.mxu0 0.0
    %106 = vmatpush1.msra.mxu0 0.0
    %107 = vmatprep.subr.mxu0 0.0
    %108 = vmatpush1.msra.mxu0 0.0
    %109 = vmatprep.subr.mxu0 0.0
    %110 = vmatpush1.msra.mxu0 0.0
    %111 = vmatprep.subr.mxu0 0.0
    %112 = vmatpush1.msra.mxu0 0.0
    %113 = vmatprep.subr.mxu0 0.0
    %114 = vmatpush1.msra.mxu0 0.0
    %115 = vmatprep.subr.mxu0 0.0
    %116 = vmatpush1.msra.mxu0 0.0
    %117 = vmatprep.subr.mxu0 0.0
    %118 = vmatpush1.msra.mxu0 0.0
    %119 = vmatprep.subr.mxu0 0.0
    %120 = vmatpush1.msra.mxu0 0.0
    %121 = vmatprep.subr.mxu0 0.0
    %122 = vmatpush1.msra.mxu0 0.0
    %123 = vmatprep.subr.mxu0 0.0
    %124 = vmatpush1.msra.mxu0 0.0
    %125 = vmatprep.subr.mxu0 0.0
    %126 = vmatpush1.msra.mxu0 0.0
    %127 = vmatprep.subr.mxu0 0.0
    %128 = vmatpush1.msra.mxu0 0.0
    %129 = vmatprep.subr.mxu0 0.0
    %130 = vmatpush1.msra.mxu0 0.0
    %131 = vmatprep.subr.mxu0 0.0
    %132 = vmatpush1.msra.mxu0 0.0
    %133 = vmatprep.subr.mxu0 0.0
    %134 = vmatpush1.msra.mxu0 0.0
    %135 = vmatprep.subr.mxu0 0.0
    %136 = vmatpush1.msra.mxu0 0.0
    %137 = vmatprep.subr.mxu0 0.0
    %138 = vmatpush1.msra.mxu0 0.0
    %139 = vmatprep.subr.mxu0 0.0
    %140 = vmatpush1.msra.mxu0 0.0
    %141 = vmatprep.subr.mxu0 0.0
    %142 = vmatpush1.msra.mxu0 0.0
    %143 = vmatprep.subr.mxu0 0.0
    %144 = vmatpush1.msra.mxu0 0.0
    %145 = vmatprep.subr.mxu0 0.0
    %146 = vmatpush1.msra.mxu0 0.0
    %147 = vmatprep.subr.mxu0 0.0
    %148 = vmatpush1.msra.mxu0 0.0
    %149 = vmatprep.subr.mxu0 0.0
    %150 = vmatpush1.msra.mxu0 0.0
    %151 = vmatprep.subr.mxu0 0.0
    %152 = vmatpush1.msra.mxu0 0.0
    %153 = vmatprep.subr.mxu0 0.0
    %154 = vmatpush1.msra.mxu0 0.0
    %155 = vmatprep.subr.mxu0 0.0
    %156 = vmatpush1.msra.mxu0 0.0
    %157 = vmatprep.mubr.f32.mxu0 0.0
    %158 = vmatmul.mubr.f32.gmra.mrb[0].mxu0 %v91
    %v159 = vpop.f32.mrb[0].mxu0
    %v160 = vadd.f32 %v87, %v159
    %v161 = vpop.f32.mrb[0].mxu0
    %162 = vdwg.mxu0
    %v163 = vmax.f32 %v160, 0.0
    %v164 = vld [vmem:[#allocation6] sm:$0xff]
    %v165 = vld [vmem:[#allocation6 + $0x8] sm:$0xff]
    %v166 = vld [vmem:[#allocation6 + $0x10] sm:$0xff]
    %v167 = vld [vmem:[#allocation6 + $0x18] sm:$0xff]
    %v168 = vld [vmem:[%s4] sm:$0x1]
    %v170 = vlaneseq
    %v171 = vshrl.u32 %v170, 7
    %v172 = vsub.s32 0, %v171
    %v173 = vrot.slane %v168, %v172
    %vm175 = vcmask 261120
    %v177 = vsel %vm175, %v163, 0
    %179 = vmatprep.subr.mxu0 0.0
    %180 = vmatpush1.msra.mxu0 %v164
    %181 = vmatprep.subr.mxu0 0.0
    %182 = vmatpush1.msra.mxu0 %v165
    %183 = vmatprep.subr.mxu0 0.0
    %184 = vmatpush1.msra.mxu0 %v166
    %185 = vmatprep.subr.mxu0 0.0
    %186 = vmatpush1.msra.mxu0 %v167
    %187 = vmatprep.subr.mxu0 0.0
    %188 = vmatpush1.msra.mxu0 0.0
    %189 = vmatprep.subr.mxu0 0.0
    %190 = vmatpush1.msra.mxu0 0.0
    %191 = vmatprep.subr.mxu0 0.0
    %192 = vmatpush1.msra.mxu0 0.0
    %193 = vmatprep.subr.mxu0 0.0
    %194 = vmatpush1.msra.mxu0 0.0
    %195 = vmatprep.subr.mxu0 0.0
    %196 = vmatpush1.msra.mxu0 0.0
    %197 = vmatprep.subr.mxu0 0.0
    %198 = vmatpush1.msra.mxu0 0.0
    %199 = vmatprep.subr.mxu0 0.0
    %200 = vmatpush1.msra.mxu0 0.0
    %201 = vmatprep.subr.mxu0 0.0
    %202 = vmatpush1.msra.mxu0 0.0
    %203 = vmatprep.subr.mxu0 0.0
    %204 = vmatpush1.msra.mxu0 0.0
    %205 = vmatprep.subr.mxu0 0.0
    %206 = vmatpush1.msra.mxu0 0.0
    %207 = vmatprep.subr.mxu0 0.0
    %208 = vmatpush1.msra.mxu0 0.0
    %209 = vmatprep.subr.mxu0 0.0
    %210 = vmatpush1.msra.mxu0 0.0
    %211 = vmatprep.subr.mxu0 0.0
    %212 = vmatpush1.msra.mxu0 0.0
    %213 = vmatprep.subr.mxu0 0.0
    %214 = vmatpush1.msra.mxu0 0.0
    %215 = vmatprep.subr.mxu0 0.0
    %216 = vmatpush1.msra.mxu0 0.0
    %217 = vmatprep.subr.mxu0 0.0
    %218 = vmatpush1.msra.mxu0 0.0
    %219 = vmatprep.subr.mxu0 0.0
    %220 = vmatpush1.msra.mxu0 0.0
    %221 = vmatprep.subr.mxu0 0.0
    %222 = vmatpush1.msra.mxu0 0.0
    %223 = vmatprep.subr.mxu0 0.0
    %224 = vmatpush1.msra.mxu0 0.0
    %225 = vmatprep.subr.mxu0 0.0
    %226 = vmatpush1.msra.mxu0 0.0
    %227 = vmatprep.subr.mxu0 0.0
    %228 = vmatpush1.msra.mxu0 0.0
    %229 = vmatprep.subr.mxu0 0.0
    %230 = vmatpush1.msra.mxu0 0.0
    %231 = vmatprep.subr.mxu0 0.0
    %232 = vmatpush1.msra.mxu0 0.0
    %233 = vmatprep.subr.mxu0 0.0
    %234 = vmatpush1.msra.mxu0 0.0
    %235 = vmatprep.subr.mxu0 0.0
    %236 = vmatpush1.msra.mxu0 0.0
    %237 = vmatprep.subr.mxu0 0.0
    %238 = vmatpush1.msra.mxu0 0.0
    %239 = vmatprep.subr.mxu0 0.0
    %240 = vmatpush1.msra.mxu0 0.0
    %241 = vmatprep.subr.mxu0 0.0
    %242 = vmatpush1.msra.mxu0 0.0
    %243 = vmatprep.mubr.f32.mxu0 0.0
    %244 = vmatmul.mubr.f32.gmra.mrb[0].mxu0 %v177
    %v245 = vpop.f32.mrb[0].mxu0
    %v246 = vadd.f32 %v173, %v245
    %v247 = vpop.f32.mrb[0].mxu0
    %248 = vdwg.mxu0
    %v249 = vmax.f32 %v246, 0.0
    %v250 = vld [vmem:[#allocation7] sm:$0xff]
    %v251 = vld [vmem:[#allocation7 + $0x8] sm:$0xff]
    %v252 = vld [vmem:[#allocation7 + $0x10] sm:$0xff]
    %v253 = vld [vmem:[#allocation7 + $0x18] sm:$0xff]
    %v254 = vld [vmem:[%s6] sm:$0x1]
    %v256 = vlaneseq
    %v257 = vshrl.u32 %v256, 7
    %v258 = vsub.s32 0, %v257
    %v259 = vrot.slane %v254, %v258
    %v262 = vsel %vm175, %v249, 0
    %264 = vmatprep.subr.mxu0 0.0
    %265 = vmatpush1.msra.mxu0 %v250
    %266 = vmatprep.subr.mxu0 0.0
    %267 = vmatpush1.msra.mxu0 %v251
    %268 = vmatprep.subr.mxu0 0.0
    %269 = vmatpush1.msra.mxu0 %v252
    %270 = vmatprep.subr.mxu0 0.0
    %271 = vmatpush1.msra.mxu0 %v253
    %272 = vmatprep.subr.mxu0 0.0
    %273 = vmatpush1.msra.mxu0 0.0
    %274 = vmatprep.subr.mxu0 0.0
    %275 = vmatpush1.msra.mxu0 0.0
    %276 = vmatprep.subr.mxu0 0.0
    %277 = vmatpush1.msra.mxu0 0.0
    %278 = vmatprep.subr.mxu0 0.0
    %279 = vmatpush1.msra.mxu0 0.0
    %280 = vmatprep.subr.mxu0 0.0
    %281 = vmatpush1.msra.mxu0 0.0
    %282 = vmatprep.subr.mxu0 0.0
    %283 = vmatpush1.msra.mxu0 0.0
    %284 = vmatprep.subr.mxu0 0.0
    %285 = vmatpush1.msra.mxu0 0.0
    %286 = vmatprep.subr.mxu0 0.0
    %287 = vmatpush1.msra.mxu0 0.0
    %288 = vmatprep.subr.mxu0 0.0
    %289 = vmatpush1.msra.mxu0 0.0
    %290 = vmatprep.subr.mxu0 0.0
    %291 = vmatpush1.msra.mxu0 0.0
    %292 = vmatprep.subr.mxu0 0.0
    %293 = vmatpush1.msra.mxu0 0.0
    %294 = vmatprep.subr.mxu0 0.0
    %295 = vmatpush1.msra.mxu0 0.0
    %296 = vmatprep.subr.mxu0 0.0
    %297 = vmatpush1.msra.mxu0 0.0
    %298 = vmatprep.subr.mxu0 0.0
    %299 = vmatpush1.msra.mxu0 0.0
    %300 = vmatprep.subr.mxu0 0.0
    %301 = vmatpush1.msra.mxu0 0.0
    %302 = vmatprep.subr.mxu0 0.0
    %303 = vmatpush1.msra.mxu0 0.0
    %304 = vmatprep.subr.mxu0 0.0
    %305 = vmatpush1.msra.mxu0 0.0
    %306 = vmatprep.subr.mxu0 0.0
    %307 = vmatpush1.msra.mxu0 0.0
    %308 = vmatprep.subr.mxu0 0.0
    %309 = vmatpush1.msra.mxu0 0.0
    %310 = vmatprep.subr.mxu0 0.0
    %311 = vmatpush1.msra.mxu0 0.0
    %312 = vmatprep.subr.mxu0 0.0
    %313 = vmatpush1.msra.mxu0 0.0
    %314 = vmatprep.subr.mxu0 0.0
    %315 = vmatpush1.msra.mxu0 0.0
    %316 = vmatprep.subr.mxu0 0.0
    %317 = vmatpush1.msra.mxu0 0.0
    %318 = vmatprep.subr.mxu0 0.0
    %319 = vmatpush1.msra.mxu0 0.0
    %320 = vmatprep.subr.mxu0 0.0
    %321 = vmatpush1.msra.mxu0 0.0
    %322 = vmatprep.subr.mxu0 0.0
    %323 = vmatpush1.msra.mxu0 0.0
    %324 = vmatprep.subr.mxu0 0.0
    %325 = vmatpush1.msra.mxu0 0.0
    %326 = vmatprep.subr.mxu0 0.0
    %327 = vmatpush1.msra.mxu0 0.0
    %328 = vmatprep.mubr.f32.mxu0 0.0
    %329 = vmatmul.mubr.f32.gmra.mrb[0].mxu0 %v262
    %v330 = vpop.f32.mrb[0].mxu0
    %v331 = vadd.f32 %v259, %v330
    %v332 = vpop.f32.mrb[0].mxu0
    %333 = vdwg.mxu0
    %334 = vst [vmem:[%s7] sm:$0xff] %v331
    // Predicated region
    $region46: #{actor_network_forward.1} parent=1 // pred_check
      _
    $region47: #{actor_network_forward.1} parent=1 // pred_check_branch
      %336 = sbr.rel (0) target = $region49
    $region48: #{actor_network_forward.1} parent=1 // pred_region
      _
    $region49: #{actor_network_forward.1} parent=1 // pred_fallthru
      _
    // Predicated region
    $region50: #{actor_network_forward.1} parent=1 // pred_check
      _
    $region51: #{actor_network_forward.1} parent=1 // pred_check_branch
      %338 = sbr.rel (0) target = $region53
    $region52: #{actor_network_forward.1} parent=1 // pred_region
      _
    $region53: #{actor_network_forward.1} parent=1 // pred_fallthru
      _
    %339 = vsyncpa [#allocation3], 1
    %340 = vsyncpa [#allocation5], 1
    %341 = vsyncpa [#allocation8], 1

</llo_original>
